<compile_context>
chip_gen: v5e
topology: v5e:2x2
jax: 0.10.0
libtpu: 0.0.40
codegen_flags: <defaults>
</compile_context>

<pallas_src>
import functools

import jax
import jax.numpy as jnp
from jax import lax
from jax.experimental import pallas as pl
from jax.experimental.pallas import tpu as pltpu


def _rnn_seq_kernel(cx_ref, h0_ref, w_cx_ref, w_h_ref, b_ref,
                    logp_ref, hT_ref, pre_scr,
                    *, hidden_size, batch_p, num_steps):
    H, Bp = hidden_size, batch_p

    # Recurrent weight loaded once for the whole sequence.
    w_h = w_h_ref[...]                                            # (H, H+O)

    # Non-recurrent contributions for ALL steps in one throughput-bound matmul:
    #   pre[t*Bp:(t+1)*Bp, :] = [category | x_t] @ W_cx + b_step
    # (o2o and both i2o/i2h biases are already folded into W_cx/W_h/b_step).
    pre_scr[...] = (jnp.dot(cx_ref[...], w_cx_ref[...],
                            preferred_element_type=jnp.float32)
                    + b_ref[...])

    # Serial recurrence: ONE small MXU dot + one VPU add per step, producing
    #   z = [h_new (0:H) | logits (H:H+O)].
    # h is carried in vregs by the (unrolled) fori_loop; raw logits are written
    # per step and normalized in a single batched pass after the loop.
    def step(t, h):
        row = pl.multiple_of(t * Bp, Bp)
        z = pre_scr[pl.ds(row, Bp), :] + jnp.dot(
            h, w_h, preferred_element_type=jnp.float32)           # (Bp, H+O)
        logp_ref[pl.ds(row, Bp), :] = z[:, H:]                    # raw logits
        return z[:, :H]                                           # h_new @ lane 0

    unroll = True if num_steps <= 16 else 8
    hT_ref[...] = lax.fori_loop(0, num_steps, step, h0_ref[...],
                                unroll=unroll)

    # Dropout(p=0.1) in eval mode == identity.
    # TODO(synk): training-mode dropout (pltpu.prng_seed/prng_random_bits mask
    #             + 1/(1-p) scaling) not implemented.

    # Numerically stable log_softmax over all T*Bp rows at once, outside the
    # serial recurrence (XLU/EUP work amortized over the whole block).
    raw = logp_ref[...]
    s = raw - jnp.max(raw, axis=-1, keepdims=True)
    logp_ref[...] = s - jnp.log(jnp.sum(jnp.exp(s), axis=-1, keepdims=True))


def _prepare_step_weights(params):
    """Host-side weight folding: o2o folded into the per-step weights.

    Column order of the fused step output is [h_new (0:H) | logits (H:H+O)] so
    the recurrent slice starts at lane 0.
    """
    O = params["b_o2o"].shape[1]
    C = params["w_c"].shape[0]
    I = params["w_x"].shape[0]
    w1 = jnp.concatenate([params["w_c"], params["w_x"], params["w_h"]],
                         axis=0)                                  # (C+I+H, O+H)
    b1 = params["b1"]                                             # (1, O+H)
    w_o2o, b_o2o = params["w_o2o"], params["b_o2o"]

    w_step = jnp.concatenate([w1[:, O:], w1 @ w_o2o], axis=1)     # (C+I+H, H+O)
    b_step = jnp.concatenate([b1[:, O:], b1 @ w_o2o + b_o2o], axis=1)  # (1, H+O)
    return w_step[:C + I], w_step[C + I:], b_step   # (C+I, H+O), (H, H+O), (1, H+O)


def generater_sequence(category, x_seq, h0, params):
    """Run the RNN cell over a whole sequence in ONE pallas_call.

    category: (B, C)  constant over the sequence
    x_seq:    (T, B, I)
    h0:       (B, H)
    Returns (logp_seq (T, B, O), h_final (B, H)); each step matches
    Generater.forward applied sequentially (eval mode).
    """
    T, B, I = x_seq.shape
    C = category.shape[1]
    H = h0.shape[1]
    O = params["b_o2o"].shape[1]

    category = category.astype(jnp.float32)
    x_seq = x_seq.astype(jnp.float32)
    h0 = h0.astype(jnp.float32)

    # Pad batch to a full f32 sublane (multiple of 8). Padded rows accumulate
    # bias-driven garbage hidden state; they are sliced off after the call.
    Bp = max(8, ((B + 7) // 8) * 8)
    pad = Bp - B
    if pad:
        category = jnp.pad(category, ((0, pad), (0, 0)))
        x_seq = jnp.pad(x_seq, ((0, 0), (0, pad), (0, 0)))
        h0 = jnp.pad(h0, ((0, pad), (0, 0)))

    # Host-side prep (outside the kernel): fold o2o into the step weights and
    # fuse [category | x_t] rows so the non-recurrent part is one big matmul.
    w_cx, w_h_step, b_step = _prepare_step_weights(params)
    cat_rep = jnp.tile(category[None], (T, 1, 1))                 # (T, Bp, C)
    cx_flat = jnp.concatenate([cat_rep, x_seq], axis=2).reshape(T * Bp, C + I)

    vm = pl.BlockSpec(memory_space=pltpu.MemorySpace.VMEM)
    kernel = functools.partial(_rnn_seq_kernel, hidden_size=H,
                               batch_p=Bp, num_steps=T)
    logp_flat, h_final = pl.pallas_call(
        kernel,
        out_shape=(jax.ShapeDtypeStruct((T * Bp, O), jnp.float32),
                   jax.ShapeDtypeStruct((Bp, H), jnp.float32)),
        in_specs=[vm] * 5,
        out_specs=(vm, vm),
        scratch_shapes=[pltpu.VMEM((T * Bp, H + O), jnp.float32)],
    )(cx_flat, h0, w_cx, w_h_step, b_step)

    logp_seq = logp_flat.reshape(T, Bp, O)[:, :B, :]
    return logp_seq, h_final[:B, :]


def generater_forward(category, x, h_state, params):
    """Single-step API, identical signature/semantics to Generater.forward."""
    logp_seq, h_new = generater_sequence(category, x[None], h_state, params)
    return logp_seq[0], h_new


def init_params(key, categorysize, inputsize, hiddensize, outsize):
    """PyTorch-Linear-style init: U(-1/sqrt(fan_in), 1/sqrt(fan_in)).

    Weights stored (in_features, out_features). i2o/i2h are fused along the
    output dim and split by input rows (category / x / h); o2o is kept separate
    here and folded into the step weights on the host by the wrapper.
    """
    cin = categorysize + inputsize + hiddensize
    oin = outsize + hiddensize
    ks = jax.random.split(key, 6)

    def lin(kw, kb, fan_in, fan_out):
        bound = 1.0 / jnp.sqrt(fan_in)
        w = jax.random.uniform(kw, (fan_in, fan_out), jnp.float32, -bound, bound)
        b = jax.random.uniform(kb, (1, fan_out), jnp.float32, -bound, bound)
        return w, b

    w_i2o, b_i2o = lin(ks[0], ks[1], cin, outsize)
    w_i2h, b_i2h = lin(ks[2], ks[3], cin, hiddensize)
    w_o2o, b_o2o = lin(ks[4], ks[5], oin, outsize)

    w_fused = jnp.concatenate([w_i2o, w_i2h], axis=1)             # (cin, O+H)
    return {
        "w_c": w_fused[:categorysize, :],
        "w_x": w_fused[categorysize:categorysize + inputsize, :],
        "w_h": w_fused[categorysize + inputsize:, :],
        "b1": jnp.concatenate([b_i2o, b_i2h], axis=1),            # (1, O+H)
        "w_o2o": w_o2o, "b_o2o": b_o2o,
    }


def reference_step(category, x, h, params):
    """Pure-JAX reference mirroring the PyTorch forward (unfused form)."""
    O = params["b_o2o"].shape[1]
    w_full = jnp.concatenate([params["w_c"], params["w_x"], params["w_h"]], axis=0)
    w_i2o, w_i2h = w_full[:, :O], w_full[:, O:]
    b_i2o, b_i2h = params["b1"][:, :O], params["b1"][:, O:]
    comb = jnp.concatenate([category, x, h], axis=1)
    out = comb @ w_i2o + b_i2o
    h_new = comb @ w_i2h + b_i2h
    z = jnp.concatenate([out, h_new], axis=1) @ params["w_o2o"] + params["b_o2o"]
    return jax.nn.log_softmax(z, axis=1), h_new


if __name__ == "__main__":
    B, categorysize, inputsize, hiddensize, outsize, T = 2, 4, 8, 32, 16, 8

    key = jax.random.PRNGKey(0)
    kp, kc, kx = jax.random.split(key, 3)

    params = init_params(kp, categorysize, inputsize, hiddensize, outsize)
    category = jax.random.normal(kc, (B, categorysize), jnp.float32)
    x_seq = jax.random.normal(kx, (T, B, inputsize), jnp.float32)
    h0 = jnp.zeros((B, hiddensize), jnp.float32)      # matches initHidden()

    # One kernel launch for the whole T-step recurrence.
    logp_seq, h_final = generater_sequence(category, x_seq, h0, params)
    logp_seq = jax.block_until_ready(logp_seq)
    h_final = jax.block_until_ready(h_final)

    # Reference: iterate the PyTorch-style cell step by step.
    h = h0
    ref_logps = []
    for t in range(T):
        lp, h = reference_step(category, x_seq[t], h, params)
        ref_logps.append(lp)
    ref_logp_seq = jnp.stack(ref_logps, axis=0)

    # Tolerance relaxed slightly vs 1e-4: host-side W1 @ W_o2o pre-multiplication
    # changes fp32 summation order marginally.
    assert logp_seq.shape == (T, B, outsize) and h_final.shape == (B, hiddensize)
    assert jnp.allclose(logp_seq, ref_logp_seq, atol=5e-4, rtol=5e-4)
    assert jnp.allclose(h_final, h, atol=5e-4, rtol=5e-4)

    # Single-step API parity with Generater.forward(category, x, h_state).
    lp1, h1 = generater_forward(category, x_seq[0], h0, params)
    ref_lp1, ref_h1 = reference_step(category, x_seq[0], h0, params)
    assert jnp.allclose(lp1, ref_lp1, atol=5e-4, rtol=5e-4)
    assert jnp.allclose(h1, ref_h1, atol=5e-4, rtol=5e-4)

    print("KERNEL_OK")
</pallas_src>

<mosaic_0001>
module attributes {stable_mosaic.version = 11 : i64} {
  func.func @_rnn_seq_kernel(%arg0: memref<64x12xf32, #tpu.memory_space<vmem>>, %arg1: memref<8x32xf32, #tpu.memory_space<vmem>>, %arg2: memref<12x48xf32, #tpu.memory_space<vmem>>, %arg3: memref<32x48xf32, #tpu.memory_space<vmem>>, %arg4: memref<1x48xf32, #tpu.memory_space<vmem>>, %arg5: memref<64x16xf32, #tpu.memory_space<vmem>>, %arg6: memref<8x32xf32, #tpu.memory_space<vmem>>, %arg7: memref<64x48xf32, #tpu.memory_space<vmem>>) attributes {dimension_semantics = [], scalar_prefetch = 0 : i64, scratch_operands = 1 : i64, tpu.core_type = #tpu.core_type<tc>} {
    %c0 = arith.constant 0 : index
    %c0_0 = arith.constant 0 : index
    %0 = vector.load %arg3[%c0, %c0_0] : memref<32x48xf32, #tpu.memory_space<vmem>>, vector<32x48xf32>
    %c0_1 = arith.constant 0 : index
    %c0_2 = arith.constant 0 : index
    %1 = vector.load %arg0[%c0_1, %c0_2] : memref<64x12xf32, #tpu.memory_space<vmem>>, vector<64x12xf32>
    %c0_3 = arith.constant 0 : index
    %c0_4 = arith.constant 0 : index
    %2 = vector.load %arg2[%c0_3, %c0_4] : memref<12x48xf32, #tpu.memory_space<vmem>>, vector<12x48xf32>
    %cst = arith.constant dense<0.000000e+00> : vector<64x48xf32>
    %3 = tpu.matmul %1, %2, %cst {dimension_numbers = #tpu.dot_dimension_numbers<[1], [0], [0], [1], [0, 0, 1, 1], [], []>} : vector<64x12xf32>, vector<12x48xf32>, vector<64x48xf32> -> vector<64x48xf32>
    %c0_5 = arith.constant 0 : index
    %c0_6 = arith.constant 0 : index
    %4 = vector.load %arg4[%c0_5, %c0_6] : memref<1x48xf32, #tpu.memory_space<vmem>>, vector<1x48xf32>
    %5 = vector.broadcast %4 : vector<1x48xf32> to vector<64x48xf32>
    %6 = arith.addf %3, %5 : vector<64x48xf32>
    %c0_7 = arith.constant 0 : index
    %c0_8 = arith.constant 0 : index
    %7 = vector.load %arg7[%c0_7, %c0_8] : memref<64x48xf32, #tpu.memory_space<vmem>>, vector<64x48xf32>
    tpu.vector_store %arg7[%c0_7, %c0_8], %6 {strides = array<i32>} : memref<64x48xf32, #tpu.memory_space<vmem>>, vector<64x48xf32>,
    %c0_9 = arith.constant 0 : index
    %c0_10 = arith.constant 0 : index
    %8 = vector.load %arg1[%c0_9, %c0_10] : memref<8x32xf32, #tpu.memory_space<vmem>>, vector<8x32xf32>
    %c0_i32 = arith.constant 0 : i32
    %c8_i32 = arith.constant 8 : i32
    %9 = arith.muli %c0_i32, %c8_i32 : i32
    %10 = tpu.assume_multiple %9, 8 : i32
    %11 = arith.index_cast %10 : i32 to index
    %c0_11 = arith.constant 0 : index
    %12 = vector.load %arg7[%11, %c0_11] : memref<64x48xf32, #tpu.memory_space<vmem>>, vector<8x48xf32>
    %cst_12 = arith.constant dense<0.000000e+00> : vector<8x48xf32>
    %13 = tpu.matmul %8, %0, %cst_12 {dimension_numbers = #tpu.dot_dimension_numbers<[1], [0], [0], [1], [0, 0, 1, 1], [], []>} : vector<8x32xf32>, vector<32x48xf32>, vector<8x48xf32> -> vector<8x48xf32>
    %14 = arith.addf %12, %13 : vector<8x48xf32>
    %15 = vector.extract_strided_slice %14 {offsets = [0, 32], sizes = [8, 16], strides = [1, 1]} : vector<8x48xf32> to vector<8x16xf32>
    %16 = arith.index_cast %10 : i32 to index
    %c0_13 = arith.constant 0 : index
    %17 = vector.load %arg5[%16, %c0_13] : memref<64x16xf32, #tpu.memory_space<vmem>>, vector<8x16xf32>
    tpu.vector_store %arg5[%16, %c0_13], %15 {strides = array<i32>} : memref<64x16xf32, #tpu.memory_space<vmem>>, vector<8x16xf32>,
    %18 = vector.extract_strided_slice %14 {offsets = [0, 0], sizes = [8, 32], strides = [1, 1]} : vector<8x48xf32> to vector<8x32xf32>
    %c1_i32 = arith.constant 1 : i32
    %c8_i32_14 = arith.constant 8 : i32
    %19 = arith.muli %c1_i32, %c8_i32_14 : i32
    %20 = tpu.assume_multiple %19, 8 : i32
    %21 = arith.index_cast %20 : i32 to index
    %c0_15 = arith.constant 0 : index
    %22 = vector.load %arg7[%21, %c0_15] : memref<64x48xf32, #tpu.memory_space<vmem>>, vector<8x48xf32>
    %cst_16 = arith.constant dense<0.000000e+00> : vector<8x48xf32>
    %23 = tpu.matmul %18, %0, %cst_16 {dimension_numbers = #tpu.dot_dimension_numbers<[1], [0], [0], [1], [0, 0, 1, 1], [], []>} : vector<8x32xf32>, vector<32x48xf32>, vector<8x48xf32> -> vector<8x48xf32>
    %24 = arith.addf %22, %23 : vector<8x48xf32>
    %25 = vector.extract_strided_slice %24 {offsets = [0, 32], sizes = [8, 16], strides = [1, 1]} : vector<8x48xf32> to vector<8x16xf32>
    %26 = arith.index_cast %20 : i32 to index
    %c0_17 = arith.constant 0 : index
    %27 = vector.load %arg5[%26, %c0_17] : memref<64x16xf32, #tpu.memory_space<vmem>>, vector<8x16xf32>
    tpu.vector_store %arg5[%26, %c0_17], %25 {strides = array<i32>} : memref<64x16xf32, #tpu.memory_space<vmem>>, vector<8x16xf32>,
    %28 = vector.extract_strided_slice %24 {offsets = [0, 0], sizes = [8, 32], strides = [1, 1]} : vector<8x48xf32> to vector<8x32xf32>
    %c2_i32 = arith.constant 2 : i32
    %c8_i32_18 = arith.constant 8 : i32
    %29 = arith.muli %c2_i32, %c8_i32_18 : i32
    %30 = tpu.assume_multiple %29, 8 : i32
    %31 = arith.index_cast %30 : i32 to index
    %c0_19 = arith.constant 0 : index
    %32 = vector.load %arg7[%31, %c0_19] : memref<64x48xf32, #tpu.memory_space<vmem>>, vector<8x48xf32>
    %cst_20 = arith.constant dense<0.000000e+00> : vector<8x48xf32>
    %33 = tpu.matmul %28, %0, %cst_20 {dimension_numbers = #tpu.dot_dimension_numbers<[1], [0], [0], [1], [0, 0, 1, 1], [], []>} : vector<8x32xf32>, vector<32x48xf32>, vector<8x48xf32> -> vector<8x48xf32>
    %34 = arith.addf %32, %33 : vector<8x48xf32>
    %35 = vector.extract_strided_slice %34 {offsets = [0, 32], sizes = [8, 16], strides = [1, 1]} : vector<8x48xf32> to vector<8x16xf32>
    %36 = arith.index_cast %30 : i32 to index
    %c0_21 = arith.constant 0 : index
    %37 = vector.load %arg5[%36, %c0_21] : memref<64x16xf32, #tpu.memory_space<vmem>>, vector<8x16xf32>
    tpu.vector_store %arg5[%36, %c0_21], %35 {strides = array<i32>} : memref<64x16xf32, #tpu.memory_space<vmem>>, vector<8x16xf32>,
    %38 = vector.extract_strided_slice %34 {offsets = [0, 0], sizes = [8, 32], strides = [1, 1]} : vector<8x48xf32> to vector<8x32xf32>
    %c3_i32 = arith.constant 3 : i32
    %c8_i32_22 = arith.constant 8 : i32
    %39 = arith.muli %c3_i32, %c8_i32_22 : i32
    %40 = tpu.assume_multiple %39, 8 : i32
    %41 = arith.index_cast %40 : i32 to index
    %c0_23 = arith.constant 0 : index
    %42 = vector.load %arg7[%41, %c0_23] : memref<64x48xf32, #tpu.memory_space<vmem>>, vector<8x48xf32>
    %cst_24 = arith.constant dense<0.000000e+00> : vector<8x48xf32>
    %43 = tpu.matmul %38, %0, %cst_24 {dimension_numbers = #tpu.dot_dimension_numbers<[1], [0], [0], [1], [0, 0, 1, 1], [], []>} : vector<8x32xf32>, vector<32x48xf32>, vector<8x48xf32> -> vector<8x48xf32>
    %44 = arith.addf %42, %43 : vector<8x48xf32>
    %45 = vector.extract_strided_slice %44 {offsets = [0, 32], sizes = [8, 16], strides = [1, 1]} : vector<8x48xf32> to vector<8x16xf32>
    %46 = arith.index_cast %40 : i32 to index
    %c0_25 = arith.constant 0 : index
    %47 = vector.load %arg5[%46, %c0_25] : memref<64x16xf32, #tpu.memory_space<vmem>>, vector<8x16xf32>
    tpu.vector_store %arg5[%46, %c0_25], %45 {strides = array<i32>} : memref<64x16xf32, #tpu.memory_space<vmem>>, vector<8x16xf32>,
    %48 = vector.extract_strided_slice %44 {offsets = [0, 0], sizes = [8, 32], strides = [1, 1]} : vector<8x48xf32> to vector<8x32xf32>
    %c4_i32 = arith.constant 4 : i32
    %c8_i32_26 = arith.constant 8 : i32
    %49 = arith.muli %c4_i32, %c8_i32_26 : i32
    %50 = tpu.assume_multiple %49, 8 : i32
    %51 = arith.index_cast %50 : i32 to index
    %c0_27 = arith.constant 0 : index
    %52 = vector.load %arg7[%51, %c0_27] : memref<64x48xf32, #tpu.memory_space<vmem>>, vector<8x48xf32>
    %cst_28 = arith.constant dense<0.000000e+00> : vector<8x48xf32>
    %53 = tpu.matmul %48, %0, %cst_28 {dimension_numbers = #tpu.dot_dimension_numbers<[1], [0], [0], [1], [0, 0, 1, 1], [], []>} : vector<8x32xf32>, vector<32x48xf32>, vector<8x48xf32> -> vector<8x48xf32>
    %54 = arith.addf %52, %53 : vector<8x48xf32>
    %55 = vector.extract_strided_slice %54 {offsets = [0, 32], sizes = [8, 16], strides = [1, 1]} : vector<8x48xf32> to vector<8x16xf32>
    %56 = arith.index_cast %50 : i32 to index
    %c0_29 = arith.constant 0 : index
    %57 = vector.load %arg5[%56, %c0_29] : memref<64x16xf32, #tpu.memory_space<vmem>>, vector<8x16xf32>
    tpu.vector_store %arg5[%56, %c0_29], %55 {strides = array<i32>} : memref<64x16xf32, #tpu.memory_space<vmem>>, vector<8x16xf32>,
    %58 = vector.extract_strided_slice %54 {offsets = [0, 0], sizes = [8, 32], strides = [1, 1]} : vector<8x48xf32> to vector<8x32xf32>
    %c5_i32 = arith.constant 5 : i32
    %c8_i32_30 = arith.constant 8 : i32
    %59 = arith.muli %c5_i32, %c8_i32_30 : i32
    %60 = tpu.assume_multiple %59, 8 : i32
    %61 = arith.index_cast %60 : i32 to index
    %c0_31 = arith.constant 0 : index
    %62 = vector.load %arg7[%61, %c0_31] : memref<64x48xf32, #tpu.memory_space<vmem>>, vector<8x48xf32>
    %cst_32 = arith.constant dense<0.000000e+00> : vector<8x48xf32>
    %63 = tpu.matmul %58, %0, %cst_32 {dimension_numbers = #tpu.dot_dimension_numbers<[1], [0], [0], [1], [0, 0, 1, 1], [], []>} : vector<8x32xf32>, vector<32x48xf32>, vector<8x48xf32> -> vector<8x48xf32>
    %64 = arith.addf %62, %63 : vector<8x48xf32>
    %65 = vector.extract_strided_slice %64 {offsets = [0, 32], sizes = [8, 16], strides = [1, 1]} : vector<8x48xf32> to vector<8x16xf32>
    %66 = arith.index_cast %60 : i32 to index
    %c0_33 = arith.constant 0 : index
    %67 = vector.load %arg5[%66, %c0_33] : memref<64x16xf32, #tpu.memory_space<vmem>>, vector<8x16xf32>
    tpu.vector_store %arg5[%66, %c0_33], %65 {strides = array<i32>} : memref<64x16xf32, #tpu.memory_space<vmem>>, vector<8x16xf32>,
    %68 = vector.extract_strided_slice %64 {offsets = [0, 0], sizes = [8, 32], strides = [1, 1]} : vector<8x48xf32> to vector<8x32xf32>
    %c6_i32 = arith.constant 6 : i32
    %c8_i32_34 = arith.constant 8 : i32
    %69 = arith.muli %c6_i32, %c8_i32_34 : i32
    %70 = tpu.assume_multiple %69, 8 : i32
    %71 = arith.index_cast %70 : i32 to index
    %c0_35 = arith.constant 0 : index
    %72 = vector.load %arg7[%71, %c0_35] : memref<64x48xf32, #tpu.memory_space<vmem>>, vector<8x48xf32>
    %cst_36 = arith.constant dense<0.000000e+00> : vector<8x48xf32>
    %73 = tpu.matmul %68, %0, %cst_36 {dimension_numbers = #tpu.dot_dimension_numbers<[1], [0], [0], [1], [0, 0, 1, 1], [], []>} : vector<8x32xf32>, vector<32x48xf32>, vector<8x48xf32> -> vector<8x48xf32>
    %74 = arith.addf %72, %73 : vector<8x48xf32>
    %75 = vector.extract_strided_slice %74 {offsets = [0, 32], sizes = [8, 16], strides = [1, 1]} : vector<8x48xf32> to vector<8x16xf32>
    %76 = arith.index_cast %70 : i32 to index
    %c0_37 = arith.constant 0 : index
    %77 = vector.load %arg5[%76, %c0_37] : memref<64x16xf32, #tpu.memory_space<vmem>>, vector<8x16xf32>
    tpu.vector_store %arg5[%76, %c0_37], %75 {strides = array<i32>} : memref<64x16xf32, #tpu.memory_space<vmem>>, vector<8x16xf32>,
    %78 = vector.extract_strided_slice %74 {offsets = [0, 0], sizes = [8, 32], strides = [1, 1]} : vector<8x48xf32> to vector<8x32xf32>
    %c7_i32 = arith.constant 7 : i32
    %c8_i32_38 = arith.constant 8 : i32
    %79 = arith.muli %c7_i32, %c8_i32_38 : i32
    %80 = tpu.assume_multiple %79, 8 : i32
    %81 = arith.index_cast %80 : i32 to index
    %c0_39 = arith.constant 0 : index
    %82 = vector.load %arg7[%81, %c0_39] : memref<64x48xf32, #tpu.memory_space<vmem>>, vector<8x48xf32>
    %cst_40 = arith.constant dense<0.000000e+00> : vector<8x48xf32>
    %83 = tpu.matmul %78, %0, %cst_40 {dimension_numbers = #tpu.dot_dimension_numbers<[1], [0], [0], [1], [0, 0, 1, 1], [], []>} : vector<8x32xf32>, vector<32x48xf32>, vector<8x48xf32> -> vector<8x48xf32>
    %84 = arith.addf %82, %83 : vector<8x48xf32>
    %85 = vector.extract_strided_slice %84 {offsets = [0, 32], sizes = [8, 16], strides = [1, 1]} : vector<8x48xf32> to vector<8x16xf32>
    %86 = arith.index_cast %80 : i32 to index
    %c0_41 = arith.constant 0 : index
    %87 = vector.load %arg5[%86, %c0_41] : memref<64x16xf32, #tpu.memory_space<vmem>>, vector<8x16xf32>
    tpu.vector_store %arg5[%86, %c0_41], %85 {strides = array<i32>} : memref<64x16xf32, #tpu.memory_space<vmem>>, vector<8x16xf32>,
    %88 = vector.extract_strided_slice %84 {offsets = [0, 0], sizes = [8, 32], strides = [1, 1]} : vector<8x48xf32> to vector<8x32xf32>
    %c8_i32_42 = arith.constant 8 : i32
    %c0_43 = arith.constant 0 : index
    %c0_44 = arith.constant 0 : index
    %89 = vector.load %arg6[%c0_43, %c0_44] : memref<8x32xf32, #tpu.memory_space<vmem>>, vector<8x32xf32>
    tpu.vector_store %arg6[%c0_43, %c0_44], %88 {strides = array<i32>} : memref<8x32xf32, #tpu.memory_space<vmem>>, vector<8x32xf32>,
    %c0_45 = arith.constant 0 : index
    %c0_46 = arith.constant 0 : index
    %90 = vector.load %arg5[%c0_45, %c0_46] : memref<64x16xf32, #tpu.memory_space<vmem>>, vector<64x16xf32>
    %cst_47 = arith.constant dense<0xFF800000> : vector<64xf32>
    %91 = vector.multi_reduction <maximumf>, %90, %cst_47 [1] : vector<64x16xf32> to vector<64xf32>
    %92 = vector.shape_cast %91 : vector<64xf32> to vector<64x1xf32>
    %93 = vector.broadcast %92 : vector<64x1xf32> to vector<64x16xf32>
    %94 = arith.subf %90, %93 : vector<64x16xf32>
    %95 = math.exp %94 : vector<64x16xf32>
    %cst_48 = arith.constant dense<0.000000e+00> : vector<64xf32>
    %96 = vector.multi_reduction <add>, %95, %cst_48 [1] : vector<64x16xf32> to vector<64xf32>
    %97 = vector.shape_cast %96 : vector<64xf32> to vector<64x1xf32>
    %98 = math.log %97 : vector<64x1xf32>
    %99 = vector.broadcast %98 : vector<64x1xf32> to vector<64x16xf32>
    %100 = arith.subf %94, %99 : vector<64x16xf32>
    %c0_49 = arith.constant 0 : index
    %c0_50 = arith.constant 0 : index
    %101 = vector.load %arg5[%c0_49, %c0_50] : memref<64x16xf32, #tpu.memory_space<vmem>>, vector<64x16xf32>
    tpu.vector_store %arg5[%c0_49, %c0_50], %100 {strides = array<i32>} : memref<64x16xf32, #tpu.memory_space<vmem>>, vector<64x16xf32>,
    return
  }
}

</mosaic_0001>

<llo_original>
// kernel: tpu_custom_call.1
$region0: #{tpu_custom_call.1}
  #allocation0 [shape = 'u32[]', space=smem, size = 0x4, offset = 0x4, fixed_abs, tag = 'smem constant byte address 0x4 - core index']
  #allocation1 [shape = 'u32[72,128]{1,0:T(1,128)}', space=vmem, size = 0x9000, scoped, tag = 'internal scratch']
  #allocation2 [shape = 'f32[64,48]{1,0:T(8,128)}', space=vmem, size = 0x8000, scoped, tag = 'scratch operand']
  %s0 = inlined_call_operand.vmem [shape: f32[64,12], index: 0, kind: input, shape index: {}]
  %s1 = inlined_call_operand.vmem [shape: f32[8,32], index: 1, kind: input, shape index: {}]
  %s2 = inlined_call_operand.vmem [shape: f32[12,48], index: 2, kind: input, shape index: {}]
  %s3 = inlined_call_operand.vmem [shape: f32[32,48], index: 3, kind: input, shape index: {}]
  %s4 = inlined_call_operand.vmem [shape: f32[1,48], index: 4, kind: input, shape index: {}]
  %s5 = inlined_call_operand.vmem [shape: f32[64,16], index: 5, kind: output, shape index: {0}]
  %s6 = inlined_call_operand.hbm [shape: f32[8,32], index: 6, kind: output, shape index: {1}]
  %7 = xla_tuple %s5, %s6
  %s8 = sld [smem:[#allocation0]]
  $region38: #{tpu_custom_call.1} parent=0
    _
  %s10 = ssub.s32 1, %s8
  %s11 = scalar_select 0, %s10, %s8
  $region1: #{tpu_custom_call.1} parent=0
    #allocation3 [shape = 'u8[4096]{0}', space=vmem, size = 0x1000, scoped, tag = 'output window, operand 1, single buffered']
    #allocation4 [shape = 's32[1]{0}', space=sflag, size = 0x4, scoped, tag = 'scoped memory for tpu_custom_call.1']
    %12 = vsyncpa [#allocation4], 0
    // Predicated region
    $region2: #{tpu_custom_call.1} parent=1 // pred_check
      _
    $region3: #{tpu_custom_call.1} parent=1 // pred_check_branch
      %14 = sbr.rel (0) target = $region5
    $region4: #{tpu_custom_call.1} parent=1 // pred_region
      _
    $region5: #{tpu_custom_call.1} parent=1 // pred_fallthru
      _
    // Predicated region
    $region6: #{tpu_custom_call.1} parent=1 // pred_check
      _
    $region7: #{tpu_custom_call.1} parent=1 // pred_check_branch
      %16 = sbr.rel (0) target = $region9
    $region8: #{tpu_custom_call.1} parent=1 // pred_region
      _
    $region9: #{tpu_custom_call.1} parent=1 // pred_fallthru
      _
    // Predicated region
    $region10: #{tpu_custom_call.1} parent=1 // pred_check
      _
    $region11: #{tpu_custom_call.1} parent=1 // pred_check_branch
      %18 = sbr.rel (0) target = $region13
    $region12: #{tpu_custom_call.1} parent=1 // pred_region
      _
    $region13: #{tpu_custom_call.1} parent=1 // pred_fallthru
      _
    // Predicated region
    $region14: #{tpu_custom_call.1} parent=1 // pred_check
      _
    $region15: #{tpu_custom_call.1} parent=1 // pred_check_branch
      %20 = sbr.rel (0) target = $region17
    $region16: #{tpu_custom_call.1} parent=1 // pred_region
      _
    $region17: #{tpu_custom_call.1} parent=1 // pred_fallthru
      _
    // Predicated region
    $region18: #{tpu_custom_call.1} parent=1 // pred_check
      _
    $region19: #{tpu_custom_call.1} parent=1 // pred_check_branch
      %22 = sbr.rel (0) target = $region21
    $region20: #{tpu_custom_call.1} parent=1 // pred_region
      _
    $region21: #{tpu_custom_call.1} parent=1 // pred_fallthru
      _
    %v23 = vld [vmem:[%s3] sm:$0xff]
    %v24 = vld [vmem:[%s3 + $0x8] sm:$0xff]
    %v25 = vld [vmem:[%s3 + $0x10] sm:$0xff]
    %v26 = vld [vmem:[%s3 + $0x18] sm:$0xff]
    %v27 = vld [vmem:[%s0] sm:$0xff]
    %v28 = vld [vmem:[%s0 + $0x8] sm:$0xff]
    %v29 = vld [vmem:[%s0 + $0x10] sm:$0xff]
    %v30 = vld [vmem:[%s0 + $0x18] sm:$0xff]
    %v31 = vld [vmem:[%s0 + $0x20] sm:$0xff]
    %v32 = vld [vmem:[%s0 + $0x28] sm:$0xff]
    %v33 = vld [vmem:[%s0 + $0x30] sm:$0xff]
    %v34 = vld [vmem:[%s0 + $0x38] sm:$0xff]
    %v35 = vld [vmem:[%s2] sm:$0xff]
    %v36 = vld [vmem:[%s2 + $0x8] sm:$0xf]
    %v37 = vld [vmem:[%s4] sm:$0x1]
    %v39 = vperm.slane %v37, 0
    %vm41 = vcmask 97280
    %v43 = vsel %vm41, %v27, 0
    %v46 = vsel %vm41, %v28, 0
    %v49 = vsel %vm41, %v29, 0
    %v52 = vsel %vm41, %v30, 0
    %v55 = vsel %vm41, %v31, 0
    %v58 = vsel %vm41, %v32, 0
    %v61 = vsel %vm41, %v33, 0
    %v64 = vsel %vm41, %v34, 0
    %vm66 = vcmask 1043456
    %v68 = vsel %vm66, %v36, 0
    %70 = vmatpush.msra.mxu0 0.0
    %71 = vmatpush.msra.mxu0 0.0
    %72 = vmatpush.msra.mxu0 0.0
    %73 = vmatpush.msra.mxu0 0.0
    %74 = vmatpush.msra.mxu0 0.0
    %75 = vmatpush.msra.mxu0 0.0
    %76 = vmatpush.msra.mxu0 0.0
    %77 = vmatpush.msra.mxu0 0.0
    %78 = vmatpush.msra.mxu0 0.0
    %79 = vmatpush.msra.mxu0 0.0
    %80 = vmatpush.msra.mxu0 0.0
    %81 = vmatpush.msra.mxu0 0.0
    %82 = vmatpush.msra.mxu0 0.0
    %83 = vmatpush.msra.mxu0 0.0
    %84 = vmatpush.msra.mxu0 %v68
    %85 = vmatpush.msra.mxu0 %v35
    %86 = vmatmul.f32.gmra.mxu0 %v43
    %v87 = vpop.f32.mrf.mxu0
    %v88 = vadd.f32 %v39, %v87
    %89 = vmatmul.f32.gmra.mxu0 %v46
    %v90 = vpop.f32.mrf.mxu0
    %v91 = vadd.f32 %v39, %v90
    %92 = vmatmul.f32.gmra.mxu0 %v49
    %v93 = vpop.f32.mrf.mxu0
    %v94 = vadd.f32 %v39, %v93
    %95 = vmatmul.f32.gmra.mxu0 %v52
    %v96 = vpop.f32.mrf.mxu0
    %v97 = vadd.f32 %v39, %v96
    %98 = vmatmul.f32.gmra.mxu0 %v55
    %v99 = vpop.f32.mrf.mxu0
    %v100 = vadd.f32 %v39, %v99
    %101 = vmatmul.f32.gmra.mxu0 %v58
    %v102 = vpop.f32.mrf.mxu0
    %v103 = vadd.f32 %v39, %v102
    %104 = vmatmul.f32.gmra.mxu0 %v61
    %v105 = vpop.f32.mrf.mxu0
    %v106 = vadd.f32 %v39, %v105
    %107 = vmatmul.f32.gmra.mxu0 %v64
    %v108 = vpop.f32.mrf.mxu0
    %v109 = vadd.f32 %v39, %v108
    %110 = vdwg.mxu0
    %vm111 = vcmask 392192
    %112 = vst.msk [vmem:[#allocation2] sm:$0xff] %vm111, %v88
    %113 = vst.msk [vmem:[#allocation2 + $0x8] sm:$0xff] %vm111, %v91
    %114 = vst.msk [vmem:[#allocation2 + $0x10] sm:$0xff] %vm111, %v94
    %115 = vst.msk [vmem:[#allocation2 + $0x18] sm:$0xff] %vm111, %v97
    %116 = vst.msk [vmem:[#allocation2 + $0x20] sm:$0xff] %vm111, %v100
    %117 = vst.msk [vmem:[#allocation2 + $0x28] sm:$0xff] %vm111, %v103
    %118 = vst.msk [vmem:[#allocation2 + $0x30] sm:$0xff] %vm111, %v106
    %119 = vst.msk [vmem:[#allocation2 + $0x38] sm:$0xff] %vm111, %v109
    %v120 = vld [vmem:[%s1] sm:$0xff]
    %v121 = vld [vmem:[#allocation2] sm:$0xff]
    %vm122 = vcmask 261120
    %v124 = vsel %vm122, %v120, 0
    %126 = vmatpush.msra.mxu0 0.0
    %127 = vmatpush.msra.mxu0 0.0
    %128 = vmatpush.msra.mxu0 0.0
    %129 = vmatpush.msra.mxu0 0.0
    %130 = vmatpush.msra.mxu0 0.0
    %131 = vmatpush.msra.mxu0 0.0
    %132 = vmatpush.msra.mxu0 0.0
    %133 = vmatpush.msra.mxu0 0.0
    %134 = vmatpush.msra.mxu0 0.0
    %135 = vmatpush.msra.mxu0 0.0
    %136 = vmatpush.msra.mxu0 0.0
    %137 = vmatpush.msra.mxu0 0.0
    %138 = vmatpush.msra.mxu0 %v26
    %139 = vmatpush.msra.mxu0 %v25
    %140 = vmatpush.msra.mxu0 %v24
    %141 = vmatpush.msra.mxu0 %v23
    %142 = vmatmul.f32.gmra.mxu0 %v124
    %v143 = vpop.f32.mrf.mxu0
    %v144 = vadd.f32 0.0, %v143
    %145 = vdwg.mxu0
    %v146 = vadd.f32 %v121, %v144
    %148 = vrot.lane.b32.xlu0 %v146, 96
    %v149 = vpop.permute.xlu0 %148
    %vm151 = vcmask 130048
    %152 = vst.msk [vmem:[%s5] sm:$0xff] %vm151, %v149
    %s153 = scalar_lea.vmem [#allocation2], 8
    %v154 = vld [vmem:[%s153] sm:$0xff]
    %v155 = vsel %vm122, %v146, 0
    %157 = vmatpush.msra.mxu0 0.0
    %158 = vmatpush.msra.mxu0 0.0
    %159 = vmatpush.msra.mxu0 0.0
    %160 = vmatpush.msra.mxu0 0.0
    %161 = vmatpush.msra.mxu0 0.0
    %162 = vmatpush.msra.mxu0 0.0
    %163 = vmatpush.msra.mxu0 0.0
    %164 = vmatpush.msra.mxu0 0.0
    %165 = vmatpush.msra.mxu0 0.0
    %166 = vmatpush.msra.mxu0 0.0
    %167 = vmatpush.msra.mxu0 0.0
    %168 = vmatpush.msra.mxu0 0.0
    %169 = vmatpush.msra.mxu0 %v26
    %170 = vmatpush.msra.mxu0 %v25
    %171 = vmatpush.msra.mxu0 %v24
    %172 = vmatpush.msra.mxu0 %v23
    %173 = vmatmul.f32.gmra.mxu0 %v155
    %v174 = vpop.f32.mrf.mxu0
    %v175 = vadd.f32 0.0, %v174
    %176 = vdwg.mxu0
    %v177 = vadd.f32 %v154, %v175
    %179 = vrot.lane.b32.xlu0 %v177, 96
    %v180 = vpop.permute.xlu0 %179
    %s182 = scalar_lea.vmem %s5, 8
    %183 = vst.msk [vmem:[%s182] sm:$0xff] %vm151, %v180
    %s184 = scalar_lea.vmem [#allocation2], 16
    %v185 = vld [vmem:[%s184] sm:$0xff]
    %v186 = vsel %vm122, %v177, 0
    %188 = vmatpush.msra.mxu0 0.0
    %189 = vmatpush.msra.mxu0 0.0
    %190 = vmatpush.msra.mxu0 0.0
    %191 = vmatpush.msra.mxu0 0.0
    %192 = vmatpush.msra.mxu0 0.0
    %193 = vmatpush.msra.mxu0 0.0
    %194 = vmatpush.msra.mxu0 0.0
    %195 = vmatpush.msra.mxu0 0.0
    %196 = vmatpush.msra.mxu0 0.0
    %197 = vmatpush.msra.mxu0 0.0
    %198 = vmatpush.msra.mxu0 0.0
    %199 = vmatpush.msra.mxu0 0.0
    %200 = vmatpush.msra.mxu0 %v26
    %201 = vmatpush.msra.mxu0 %v25
    %202 = vmatpush.msra.mxu0 %v24
    %203 = vmatpush.msra.mxu0 %v23
    %204 = vmatmul.f32.gmra.mxu0 %v186
    %v205 = vpop.f32.mrf.mxu0
    %v206 = vadd.f32 0.0, %v205
    %207 = vdwg.mxu0
    %v208 = vadd.f32 %v185, %v206
    %210 = vrot.lane.b32.xlu0 %v208, 96
    %v211 = vpop.permute.xlu0 %210
    %s213 = scalar_lea.vmem %s5, 16
    %214 = vst.msk [vmem:[%s213] sm:$0xff] %vm151, %v211
    %s215 = scalar_lea.vmem [#allocation2], 24
    %v216 = vld [vmem:[%s215] sm:$0xff]
    %v217 = vsel %vm122, %v208, 0
    %219 = vmatpush.msra.mxu0 0.0
    %220 = vmatpush.msra.mxu0 0.0
    %221 = vmatpush.msra.mxu0 0.0
    %222 = vmatpush.msra.mxu0 0.0
    %223 = vmatpush.msra.mxu0 0.0
    %224 = vmatpush.msra.mxu0 0.0
    %225 = vmatpush.msra.mxu0 0.0
    %226 = vmatpush.msra.mxu0 0.0
    %227 = vmatpush.msra.mxu0 0.0
    %228 = vmatpush.msra.mxu0 0.0
    %229 = vmatpush.msra.mxu0 0.0
    %230 = vmatpush.msra.mxu0 0.0
    %231 = vmatpush.msra.mxu0 %v26
    %232 = vmatpush.msra.mxu0 %v25
    %233 = vmatpush.msra.mxu0 %v24
    %234 = vmatpush.msra.mxu0 %v23
    %235 = vmatmul.f32.gmra.mxu0 %v217
    %v236 = vpop.f32.mrf.mxu0
    %v237 = vadd.f32 0.0, %v236
    %238 = vdwg.mxu0
    %v239 = vadd.f32 %v216, %v237
    %241 = vrot.lane.b32.xlu0 %v239, 96
    %v242 = vpop.permute.xlu0 %241
    %s244 = scalar_lea.vmem %s5, 24
    %245 = vst.msk [vmem:[%s244] sm:$0xff] %vm151, %v242
    %s246 = scalar_lea.vmem [#allocation2], 32
    %v247 = vld [vmem:[%s246] sm:$0xff]
    %v248 = vsel %vm122, %v239, 0
    %250 = vmatpush.msra.mxu0 0.0
    %251 = vmatpush.msra.mxu0 0.0
    %252 = vmatpush.msra.mxu0 0.0
    %253 = vmatpush.msra.mxu0 0.0
    %254 = vmatpush.msra.mxu0 0.0
    %255 = vmatpush.msra.mxu0 0.0
    %256 = vmatpush.msra.mxu0 0.0
    %257 = vmatpush.msra.mxu0 0.0
    %258 = vmatpush.msra.mxu0 0.0
    %259 = vmatpush.msra.mxu0 0.0
    %260 = vmatpush.msra.mxu0 0.0
    %261 = vmatpush.msra.mxu0 0.0
    %262 = vmatpush.msra.mxu0 %v26
    %263 = vmatpush.msra.mxu0 %v25
    %264 = vmatpush.msra.mxu0 %v24
    %265 = vmatpush.msra.mxu0 %v23
    %266 = vmatmul.f32.gmra.mxu0 %v248
    %v267 = vpop.f32.mrf.mxu0
    %v268 = vadd.f32 0.0, %v267
    %269 = vdwg.mxu0
    %v270 = vadd.f32 %v247, %v268
    %272 = vrot.lane.b32.xlu0 %v270, 96
    %v273 = vpop.permute.xlu0 %272
    %s275 = scalar_lea.vmem %s5, 32
    %276 = vst.msk [vmem:[%s275] sm:$0xff] %vm151, %v273
    %s277 = scalar_lea.vmem [#allocation2], 40
    %v278 = vld [vmem:[%s277] sm:$0xff]
    %v279 = vsel %vm122, %v270, 0
    %281 = vmatpush.msra.mxu0 0.0
    %282 = vmatpush.msra.mxu0 0.0
    %283 = vmatpush.msra.mxu0 0.0
    %284 = vmatpush.msra.mxu0 0.0
    %285 = vmatpush.msra.mxu0 0.0
    %286 = vmatpush.msra.mxu0 0.0
    %287 = vmatpush.msra.mxu0 0.0
    %288 = vmatpush.msra.mxu0 0.0
    %289 = vmatpush.msra.mxu0 0.0
    %290 = vmatpush.msra.mxu0 0.0
    %291 = vmatpush.msra.mxu0 0.0
    %292 = vmatpush.msra.mxu0 0.0
    %293 = vmatpush.msra.mxu0 %v26
    %294 = vmatpush.msra.mxu0 %v25
    %295 = vmatpush.msra.mxu0 %v24
    %296 = vmatpush.msra.mxu0 %v23
    %297 = vmatmul.f32.gmra.mxu0 %v279
    %v298 = vpop.f32.mrf.mxu0
    %v299 = vadd.f32 0.0, %v298
    %300 = vdwg.mxu0
    %v301 = vadd.f32 %v278, %v299
    %303 = vrot.lane.b32.xlu0 %v301, 96
    %v304 = vpop.permute.xlu0 %303
    %s306 = scalar_lea.vmem %s5, 40
    %307 = vst.msk [vmem:[%s306] sm:$0xff] %vm151, %v304
    %s308 = scalar_lea.vmem [#allocation2], 48
    %v309 = vld [vmem:[%s308] sm:$0xff]
    %v310 = vsel %vm122, %v301, 0
    %312 = vmatpush.msra.mxu0 0.0
    %313 = vmatpush.msra.mxu0 0.0
    %314 = vmatpush.msra.mxu0 0.0
    %315 = vmatpush.msra.mxu0 0.0
    %316 = vmatpush.msra.mxu0 0.0
    %317 = vmatpush.msra.mxu0 0.0
    %318 = vmatpush.msra.mxu0 0.0
    %319 = vmatpush.msra.mxu0 0.0
    %320 = vmatpush.msra.mxu0 0.0
    %321 = vmatpush.msra.mxu0 0.0
    %322 = vmatpush.msra.mxu0 0.0
    %323 = vmatpush.msra.mxu0 0.0
    %324 = vmatpush.msra.mxu0 %v26
    %325 = vmatpush.msra.mxu0 %v25
    %326 = vmatpush.msra.mxu0 %v24
    %327 = vmatpush.msra.mxu0 %v23
    %328 = vmatmul.f32.gmra.mxu0 %v310
    %v329 = vpop.f32.mrf.mxu0
    %v330 = vadd.f32 0.0, %v329
    %331 = vdwg.mxu0
    %v332 = vadd.f32 %v309, %v330
    %334 = vrot.lane.b32.xlu0 %v332, 96
    %v335 = vpop.permute.xlu0 %334
    %s337 = scalar_lea.vmem %s5, 48
    %338 = vst.msk [vmem:[%s337] sm:$0xff] %vm151, %v335
    %s339 = scalar_lea.vmem [#allocation2], 56
    %v340 = vld [vmem:[%s339] sm:$0xff]
    %v341 = vsel %vm122, %v332, 0
    %343 = vmatpush.msra.mxu0 0.0
    %344 = vmatpush.msra.mxu0 0.0
    %345 = vmatpush.msra.mxu0 0.0
    %346 = vmatpush.msra.mxu0 0.0
    %347 = vmatpush.msra.mxu0 0.0
    %348 = vmatpush.msra.mxu0 0.0
    %349 = vmatpush.msra.mxu0 0.0
    %350 = vmatpush.msra.mxu0 0.0
    %351 = vmatpush.msra.mxu0 0.0
    %352 = vmatpush.msra.mxu0 0.0
    %353 = vmatpush.msra.mxu0 0.0
    %354 = vmatpush.msra.mxu0 0.0
    %355 = vmatpush.msra.mxu0 %v26
    %356 = vmatpush.msra.mxu0 %v25
    %357 = vmatpush.msra.mxu0 %v24
    %358 = vmatpush.msra.mxu0 %v23
    %359 = vmatmul.f32.gmra.mxu0 %v341
    %v360 = vpop.f32.mrf.mxu0
    %v361 = vadd.f32 0.0, %v360
    %362 = vdwg.mxu0
    %v363 = vadd.f32 %v340, %v361
    %365 = vrot.lane.b32.xlu0 %v363, 96
    %v366 = vpop.permute.xlu0 %365
    %s368 = scalar_lea.vmem %s5, 56
    %369 = vst.msk [vmem:[%s368] sm:$0xff] %vm151, %v366
    %370 = vst.msk [vmem:[#allocation3] sm:$0xff] %vm122, %v363
    %v371 = vld [vmem:[%s5] sm:$0xff]
    %v372 = vld [vmem:[%s5 + $0x8] sm:$0xff]
    %v373 = vld [vmem:[%s5 + $0x10] sm:$0xff]
    %v374 = vld [vmem:[%s5 + $0x18] sm:$0xff]
    %v375 = vld [vmem:[%s5 + $0x20] sm:$0xff]
    %v376 = vld [vmem:[%s5 + $0x28] sm:$0xff]
    %v377 = vld [vmem:[%s5 + $0x30] sm:$0xff]
    %v378 = vld [vmem:[%s5 + $0x38] sm:$0xff]
    %v379 = vsel %vm151, %v371, -inf
    %380 = vmax.xlane.f32.xlu0 %v379
    %v381 = vpop.xlane.xlu0 %380
    %v382 = vsel %vm151, %v372, -inf
    %383 = vmax.xlane.f32.xlu0 %v382
    %v384 = vpop.xlane.xlu0 %383
    %v385 = vsel %vm151, %v373, -inf
    %386 = vmax.xlane.f32.xlu0 %v385
    %v387 = vpop.xlane.xlu0 %386
    %v388 = vsel %vm151, %v374, -inf
    %389 = vmax.xlane.f32.xlu0 %v388
    %v390 = vpop.xlane.xlu0 %389
    %v391 = vsel %vm151, %v375, -inf
    %392 = vmax.xlane.f32.xlu0 %v391
    %v393 = vpop.xlane.xlu0 %392
    %v394 = vsel %vm151, %v376, -inf
    %395 = vmax.xlane.f32.xlu0 %v394
    %v396 = vpop.xlane.xlu0 %395
    %v397 = vsel %vm151, %v377, -inf
    %398 = vmax.xlane.f32.xlu0 %v397
    %v399 = vpop.xlane.xlu0 %398
    %v400 = vsel %vm151, %v378, -inf
    %401 = vmax.xlane.f32.xlu0 %v400
    %v402 = vpop.xlane.xlu0 %401
    %v403 = vsub.f32 %v371, %v381
    %v404 = vsub.f32 %v372, %v384
    %v405 = vsub.f32 %v373, %v387
    %v406 = vsub.f32 %v374, %v390
    %v407 = vsub.f32 %v375, %v393
    %v408 = vsub.f32 %v376, %v396
    %v409 = vsub.f32 %v377, %v399
    %v410 = vsub.f32 %v378, %v402
    %v411 = vmul.f32 %v403, 1.442695
    %v412 = vpow.pop %v411
    %v413 = vmul.f32 %v404, 1.442695
    %v414 = vpow.pop %v413
    %v415 = vmul.f32 %v405, 1.442695
    %v416 = vpow.pop %v415
    %v417 = vmul.f32 %v406, 1.442695
    %v418 = vpow.pop %v417
    %v419 = vmul.f32 %v407, 1.442695
    %v420 = vpow.pop %v419
    %v421 = vmul.f32 %v408, 1.442695
    %v422 = vpow.pop %v421
    %v423 = vmul.f32 %v409, 1.442695
    %v424 = vpow.pop %v423
    %v425 = vmul.f32 %v410, 1.442695
    %v426 = vpow.pop %v425
    %v427 = vsel %vm151, %v412, 0.0
    %428 = vadd.xlane.f32.xlu0 %v427
    %v429 = vpop.xlane.xlu0 %428
    %v430 = vsel %vm151, %v414, 0.0
    %431 = vadd.xlane.f32.xlu0 %v430
    %v432 = vpop.xlane.xlu0 %431
    %v433 = vsel %vm151, %v416, 0.0
    %434 = vadd.xlane.f32.xlu0 %v433
    %v435 = vpop.xlane.xlu0 %434
    %v436 = vsel %vm151, %v418, 0.0
    %437 = vadd.xlane.f32.xlu0 %v436
    %v438 = vpop.xlane.xlu0 %437
    %v439 = vsel %vm151, %v420, 0.0
    %440 = vadd.xlane.f32.xlu0 %v439
    %v441 = vpop.xlane.xlu0 %440
    %v442 = vsel %vm151, %v422, 0.0
    %443 = vadd.xlane.f32.xlu0 %v442
    %v444 = vpop.xlane.xlu0 %443
    %v445 = vsel %vm151, %v424, 0.0
    %446 = vadd.xlane.f32.xlu0 %v445
    %v447 = vpop.xlane.xlu0 %446
    %v448 = vsel %vm151, %v426, 0.0
    %449 = vadd.xlane.f32.xlu0 %v448
    %v450 = vpop.xlane.xlu0 %449
    %v451 = vlog2.pop %v429
    %v452 = vmul.f32 %v451, 0.6931472
    %v453 = vlog2.pop %v432
    %v454 = vmul.f32 %v453, 0.6931472
    %v455 = vlog2.pop %v435
    %v456 = vmul.f32 %v455, 0.6931472
    %v457 = vlog2.pop %v438
    %v458 = vmul.f32 %v457, 0.6931472
    %v459 = vlog2.pop %v441
    %v460 = vmul.f32 %v459, 0.6931472
    %v461 = vlog2.pop %v444
    %v462 = vmul.f32 %v461, 0.6931472
    %v463 = vlog2.pop %v447
    %v464 = vmul.f32 %v463, 0.6931472
    %v465 = vlog2.pop %v450
    %v466 = vmul.f32 %v465, 0.6931472
    %v467 = vsub.f32 %v403, %v452
    %v468 = vsub.f32 %v404, %v454
    %v469 = vsub.f32 %v405, %v456
    %v470 = vsub.f32 %v406, %v458
    %v471 = vsub.f32 %v407, %v460
    %v472 = vsub.f32 %v408, %v462
    %v473 = vsub.f32 %v409, %v464
    %v474 = vsub.f32 %v410, %v466
    %475 = vst.msk [vmem:[%s5] sm:$0xff] %vm151, %v467
    %476 = vst.msk [vmem:[%s5 + $0x8] sm:$0xff] %vm151, %v468
    %477 = vst.msk [vmem:[%s5 + $0x10] sm:$0xff] %vm151, %v469
    %478 = vst.msk [vmem:[%s5 + $0x18] sm:$0xff] %vm151, %v470
    %479 = vst.msk [vmem:[%s5 + $0x20] sm:$0xff] %vm151, %v471
    %480 = vst.msk [vmem:[%s5 + $0x28] sm:$0xff] %vm151, %v472
    %481 = vst.msk [vmem:[%s5 + $0x30] sm:$0xff] %vm151, %v473
    %482 = vst.msk [vmem:[%s5 + $0x38] sm:$0xff] %vm151, %v474
    // Predicated region
    $region22: #{tpu_custom_call.1} parent=1 // pred_check
      _
    $region23: #{tpu_custom_call.1} parent=1 // pred_check_branch
      %484 = sbr.rel (0) target = $region25
    $region24: #{tpu_custom_call.1} parent=1 // pred_region
      _
    $region25: #{tpu_custom_call.1} parent=1 // pred_fallthru
      _
    // Predicated region
    $region26: #{tpu_custom_call.1} parent=1 // pred_check
      _
    $region27: #{tpu_custom_call.1} parent=1 // pred_check_branch
      %486 = sbr.rel (0) target = $region29
    $region28: #{tpu_custom_call.1} parent=1 // pred_region
      %488 = vsyncadd [#allocation4], 0
      %s490 = sshll.u32 [#allocation3], 4
      %s491 = int_to_ptr.vmem [resolvable:$true] %s490
      %s492 = sshll.u32 %s6, 4
      %s493 = int_to_ptr.hbm [resolvable:$true] %s492
      %495 = dma.vmem_to_hbm [thread:$0]  %s491, 128, %s493, [#allocation4]
    $region29: #{tpu_custom_call.1} parent=1 // pred_fallthru
      _
    // Predicated region
    $region30: #{tpu_custom_call.1} parent=1 // pred_check
      _
    $region31: #{tpu_custom_call.1} parent=1 // pred_check_branch
      %497 = sbr.rel (0) target = $region33
    $region32: #{tpu_custom_call.1} parent=1 // pred_region
      _
    $region33: #{tpu_custom_call.1} parent=1 // pred_fallthru
      _
    // Predicated region
    $region34: #{tpu_custom_call.1} parent=1 // pred_check
      _
    $region35: #{tpu_custom_call.1} parent=1 // pred_check_branch
      %499 = sbr.rel (0) target = $region37
    $region36: #{tpu_custom_call.1} parent=1 // pred_region
      %501 = dma.done [#allocation4], 128
    $region37: #{tpu_custom_call.1} parent=1 // pred_fallthru
      _
    %502 = vsyncpa [#allocation4], 1

</llo_original>
